<compile_context>
chip_gen: v6e
topology: v6e:2x2x1
jax: 0.10.0
libtpu: 0.0.40
codegen_flags: <defaults>
</compile_context>

<pallas_src>
import functools

import jax
import jax.numpy as jnp
from jax.experimental import pallas as pl
from jax.experimental.pallas import tpu as pltpu

# ---------------------------------------------------------------------------
# Static model configuration (a concrete TAGNet_ray instantiation).
# ---------------------------------------------------------------------------
NUM_NODES = 10
NUM_LAYERS = 3
NUM_CHANNELS = [1, 16, 4, 1]          # len == NUM_LAYERS + 1
ACTIVATION = ["relu", "relu", None]   # per layer
K_HOPS = [3, 2, 1]                    # per layer TAGConv K
BATCH_NORM = [True, True, True]       # batch_norm_index
FINAL_LINEAR = True                   # endLinear = nn.Linear(1, 1)
FINAL_SIGMOID = True
BN_EPS = 1e-5

# Padded (TPU-friendly) shapes. Zero padding is exact: padded node rows/cols of
# A_hat are zero and padded channel lanes stay zero through every layer, so the
# valid [:N, :C] slice of the output is unchanged.
N_PAD = 16
C_PAD = 128


# ---------------------------------------------------------------------------
# Host-side helpers (run once, outside the per-inference path).
# ---------------------------------------------------------------------------
def _pad2(x, rows, cols):
    x = jnp.asarray(x, jnp.float32)
    return jnp.pad(x, ((0, rows - x.shape[0]), (0, cols - x.shape[1])))


def gcn_norm_dense(edge_index, edge_weight, num_nodes):
    """PyG gcn_norm with add_self_loops=False (TAGConv semantics), returned as
    a dense A_hat [N, N] such that propagate(x) == A_hat @ x
    (out[col] += norm * x[row], flow='source_to_target')."""
    row, col = edge_index[0], edge_index[1]
    deg = jnp.zeros((num_nodes,), edge_weight.dtype).at[col].add(edge_weight)
    dinv = jnp.where(deg > 0, jax.lax.rsqrt(deg), 0.0)
    norm = dinv[row] * edge_weight * dinv[col]
    a = jnp.zeros((num_nodes, num_nodes), edge_weight.dtype).at[col, row].add(norm)
    return a


def stack_adjacency_powers(a_dense, k_max):
    """Pad A_hat to [N_PAD, N_PAD] and vertically stack [A, A^2, ..., A^Kmax]
    into one [Kmax*N_PAD, N_PAD] slab (one-time graph prep)."""
    k_max = max(1, k_max)
    a_pad = _pad2(a_dense, N_PAD, N_PAD)
    pows, ak = [], a_pad
    for _ in range(k_max):
        pows.append(ak)
        ak = a_pad @ ak
    return jnp.concatenate(pows, axis=0)                  # [Kmax*N_PAD, N_PAD]


def fold_and_pack_params(params):
    """Fold BN (eval) and, when legal, the final Linear(1,1) into the TAGConv
    weights/biases; pack everything into one compact weight slab + one bias/row
    slab.

    Returns:
      w_slab      [n_mxu, 128, 128]  row-stacked hop weights for C_in > 1 layers
      b_slab      [R, 128]           rows [0:L]  = per-layer folded biases
                                     rows [L:..] = hop-weight rows for C_in == 1 layers
      layer_specs tuple of (K, c_in, act, mode, idx); mode 'vpu' => idx is the
                  first hop-row in b_slab, mode 'mxu' => idx indexes w_slab.
    """
    last_act = ACTIVATION[NUM_LAYERS - 1]
    fold_final = FINAL_LINEAR and last_act in (None, "None")

    folded = []
    for i in range(NUM_LAYERS):
        K = K_HOPS[i]
        ws = [jnp.asarray(params[f"w{i}_{k}"], jnp.float32) for k in range(K + 1)]
        b = jnp.asarray(params[f"b{i}"], jnp.float32)
        if BATCH_NORM[i]:
            s = params[f"bn{i}_gamma"] / jnp.sqrt(params[f"bn{i}_var"] + BN_EPS)
            t = params[f"bn{i}_beta"] - params[f"bn{i}_mean"] * s
            ws = [w * s[None, :] for w in ws]
            b = b * s + t
        if i == NUM_LAYERS - 1 and fold_final:
            wl = jnp.asarray(params["wl"], jnp.float32)   # (in=1, out=1)
            bl = jnp.asarray(params["bl"], jnp.float32)
            ws = [w @ wl for w in ws]
            b = b @ wl + bl
        folded.append((ws, b, NUM_CHANNELS[i], K, ACTIVATION[i]))

    if FINAL_LINEAR and not fold_final:
        # Could not fold (activation after last conv): run endLinear as an
        # extra K=0 "layer" inside the kernel.
        folded.append(([jnp.asarray(params["wl"], jnp.float32)],
                       jnp.asarray(params["bl"], jnp.float32),
                       NUM_CHANNELS[-1], 0, None))

    n_layers = len(folded)
    specs, mxu_mats, bias_rows, vpu_rows = [], [], [], []
    row_cursor = n_layers                                  # vpu rows follow biases
    for li, (ws, b, c_in, K, act) in enumerate(folded):
        bias_rows.append(_pad2(b[None, :], 1, C_PAD))
        if c_in == 1:
            specs.append((K, 1, act, "vpu", row_cursor))
            vpu_rows.extend(_pad2(w, 1, C_PAD) for w in ws)
            row_cursor += len(ws)
        else:
            assert (K + 1) * c_in <= C_PAD, "hop-stacked rows exceed 128 lanes"
            stacked = jnp.zeros((C_PAD, C_PAD), jnp.float32)
            for k, w in enumerate(ws):
                stacked = stacked.at[k * c_in:(k + 1) * c_in, :w.shape[1]].set(w)
            specs.append((K, c_in, act, "mxu", len(mxu_mats)))
            mxu_mats.append(stacked)

    w_slab = (jnp.stack(mxu_mats, axis=0) if mxu_mats
              else jnp.zeros((1, C_PAD, C_PAD), jnp.float32))
    total_rows = row_cursor
    n_rows = max(8, ((total_rows + 7) // 8) * 8)
    rows = jnp.concatenate(bias_rows + vpu_rows, axis=0)
    b_slab = jnp.zeros((n_rows, C_PAD), jnp.float32).at[:total_rows].set(rows)
    return w_slab, b_slab, tuple(specs)


# ---------------------------------------------------------------------------
# Fused Pallas kernel.
# ---------------------------------------------------------------------------
def _make_kernel(layer_specs, final_sigmoid):
    def kernel(p_ref, x_ref, w_ref, b_ref, o_ref):
        h = x_ref[...]                                     # [N_PAD, C_PAD]
        for li, (k_hops, c_in, act, mode, idx) in enumerate(layer_specs):
            # All hop features from ONE dot against the stacked powers slab:
            # rows [(k-1)*N_PAD : k*N_PAD] of `hops` hold A^k @ h.
            hops = None
            if k_hops > 0:
                hops = jnp.dot(p_ref[0:k_hops * N_PAD, :], h,
                               preferred_element_type=jnp.float32)
            if mode == "vpu":
                # real in_channels == 1: feature transform is K+1 broadcast
                # outer-products (column x hop-weight row) on the VPU.
                out = h[:, 0:1] * b_ref[idx:idx + 1, :]
                for k in range(1, k_hops + 1):
                    col = hops[(k - 1) * N_PAD:k * N_PAD, 0:1]
                    out = out + col * b_ref[idx + k:idx + k + 1, :]
            else:
                # Pack hop-k features into lanes [k*c_in:(k+1)*c_in] (XLU roll;
                # wrapped lanes are zero because (K+1)*c_in <= 128), then ONE
                # MXU dot against the row-stacked weight matrix.
                hstack = h
                for k in range(1, k_hops + 1):
                    hk = hops[(k - 1) * N_PAD:k * N_PAD, :]
                    hstack = hstack + pltpu.roll(hk, shift=k * c_in, axis=1)
                out = jnp.dot(hstack, w_ref[idx],
                              preferred_element_type=jnp.float32)
            out = out + b_ref[li:li + 1, :]                # folded bias (+BN +endLinear)
            if act == "relu":
                out = jnp.maximum(out, 0.0)
            h = out
        if final_sigmoid:
            h = jax.nn.sigmoid(h)
        o_ref[...] = h

    return kernel


@functools.partial(jax.jit, static_argnames=("layer_specs", "final_sigmoid"))
def tag_net_pallas(a_pows, x_pad, w_slab, b_slab, *, layer_specs, final_sigmoid):
    """Jitted per-inference path: only the fused pallas_call."""
    kernel = _make_kernel(layer_specs, final_sigmoid)

    # Tiny-but-honest cost estimate so XLA doesn't schedule conservatively.
    flops = 0
    for (k_hops, c_in, _act, mode, _idx) in layer_specs:
        if k_hops > 0:
            flops += 2 * (k_hops * N_PAD) * N_PAD * C_PAD          # stacked propagation
        if mode == "mxu":
            flops += 2 * N_PAD * C_PAD * C_PAD                     # fused feature dot
            flops += k_hops * N_PAD * C_PAD                        # roll-adds
        else:
            flops += (2 * k_hops + 1) * N_PAD * C_PAD              # VPU outer products
        flops += 2 * N_PAD * C_PAD                                 # bias + act
    bytes_accessed = 4 * (a_pows.size + x_pad.size + w_slab.size
                          + b_slab.size + N_PAD * C_PAD)

    return pl.pallas_call(
        kernel,
        out_shape=jax.ShapeDtypeStruct((N_PAD, C_PAD), jnp.float32),
        in_specs=[pl.BlockSpec(memory_space=pltpu.MemorySpace.VMEM)] * 4,
        out_specs=pl.BlockSpec(memory_space=pltpu.MemorySpace.VMEM),
        cost_estimate=pl.CostEstimate(
            flops=flops,
            transcendentals=N_PAD * C_PAD if final_sigmoid else 0,
            bytes_accessed=bytes_accessed),
    )(a_pows, x_pad, w_slab, b_slab)


# ---------------------------------------------------------------------------
# Pure-JAX reference (same eval-mode semantics, unfolded).
# ---------------------------------------------------------------------------
def reference_forward(x, edge_index, edge_weight, params):
    a = gcn_norm_dense(edge_index, edge_weight, x.shape[0])
    h = x
    for i in range(NUM_LAYERS):
        K = K_HOPS[i]
        out = h @ params[f"w{i}_0"]
        xk = h
        for k in range(1, K + 1):
            xk = a @ xk
            out = out + xk @ params[f"w{i}_{k}"]
        out = out + params[f"b{i}"]
        if BATCH_NORM[i]:
            out = ((out - params[f"bn{i}_mean"])
                   / jnp.sqrt(params[f"bn{i}_var"] + BN_EPS)
                   * params[f"bn{i}_gamma"] + params[f"bn{i}_beta"])
        if ACTIVATION[i] == "relu":
            out = jnp.maximum(out, 0.0)
        h = out
    if FINAL_LINEAR:
        h = h @ params["wl"] + params["bl"]
    if FINAL_SIGMOID:
        h = jax.nn.sigmoid(h)
    return h


def init_params(key):
    ks = iter(jax.random.split(key, 64))

    def glorot(k, shape):
        fan_in, fan_out = shape
        lim = jnp.sqrt(6.0 / (fan_in + fan_out))
        return jax.random.uniform(k, shape, jnp.float32, -lim, lim)

    p = {}
    for i in range(NUM_LAYERS):
        c_in, c_out = NUM_CHANNELS[i], NUM_CHANNELS[i + 1]
        for k in range(K_HOPS[i] + 1):
            p[f"w{i}_{k}"] = glorot(next(ks), (c_in, c_out))
        p[f"b{i}"] = jnp.zeros((c_out,), jnp.float32)       # PyG TAGConv bias init
        if BATCH_NORM[i]:
            p[f"bn{i}_gamma"] = 0.5 + jax.random.uniform(next(ks), (c_out,))
            p[f"bn{i}_beta"] = 0.1 * jax.random.normal(next(ks), (c_out,))
            p[f"bn{i}_mean"] = 0.1 * jax.random.normal(next(ks), (c_out,))
            p[f"bn{i}_var"] = 0.5 + jax.random.uniform(next(ks), (c_out,))
    if FINAL_LINEAR:
        p["wl"] = glorot(next(ks), (1, 1))                  # nn.Linear(1, 1), (in, out)
        p["bl"] = 0.1 * jax.random.normal(next(ks), (1,))
    return p


if __name__ == "__main__":
    key = jax.random.PRNGKey(0)
    k_x, k_w, k_p = jax.random.split(key, 3)

    # deterministic small graph: 10 nodes, directed ring + a few chords
    x = jax.random.normal(k_x, (NUM_NODES, NUM_CHANNELS[0]), jnp.float32)
    row = jnp.array([0, 1, 2, 3, 4, 5, 6, 7, 8, 9, 0, 2, 4, 6, 8], jnp.int32)
    col = jnp.array([1, 2, 3, 4, 5, 6, 7, 8, 9, 0, 5, 7, 9, 1, 3], jnp.int32)
    edge_index = jnp.stack([row, col])
    edge_weight = 0.5 + jax.random.uniform(k_w, (row.shape[0],), jnp.float32)

    params = init_params(k_p)

    # One-time host-side prep (graph normalization + stacked adjacency powers
    # + folded/packed parameters), hoisted out of the per-inference path.
    a_hat = gcn_norm_dense(edge_index, edge_weight, NUM_NODES)
    a_pows = stack_adjacency_powers(a_hat, max(K_HOPS))     # [Kmax*N_PAD, N_PAD]
    x_pad = _pad2(x, N_PAD, C_PAD)
    w_slab, b_slab, layer_specs = fold_and_pack_params(params)

    out_pad = tag_net_pallas(a_pows, x_pad, w_slab, b_slab,
                             layer_specs=layer_specs,
                             final_sigmoid=FINAL_SIGMOID)
    out_pad = jax.block_until_ready(out_pad)

    out_ch = 1 if FINAL_LINEAR else NUM_CHANNELS[-1]
    out = out_pad[:NUM_NODES, :out_ch]

    ref = reference_forward(x, edge_index, edge_weight, params)
    assert out.shape == (NUM_NODES, out_ch)
    assert jnp.allclose(out, ref, atol=1e-5, rtol=1e-5), (out, ref)

    print("KERNEL_OK")
</pallas_src>

<mosaic_0001>
module attributes {stable_mosaic.version = 11 : i64} {
  func.func @kernel(%arg0: memref<48x16xf32, #tpu.memory_space<vmem>>, %arg1: memref<16x128xf32, #tpu.memory_space<vmem>>, %arg2: memref<2x128x128xf32, #tpu.memory_space<vmem>>, %arg3: memref<8x128xf32, #tpu.memory_space<vmem>>, %arg4: memref<16x128xf32, #tpu.memory_space<vmem>>) attributes {dimension_semantics = [], scalar_prefetch = 0 : i64, scratch_operands = 0 : i64, tpu.core_type = #tpu.core_type<tc>} {
    %c0 = arith.constant 0 : index
    %c0_0 = arith.constant 0 : index
    %0 = vector.load %arg1[%c0, %c0_0] : memref<16x128xf32, #tpu.memory_space<vmem>>, vector<16x128xf32>
    %c0_1 = arith.constant 0 : index
    %c0_2 = arith.constant 0 : index
    %1 = vector.load %arg0[%c0_1, %c0_2] : memref<48x16xf32, #tpu.memory_space<vmem>>, vector<48x16xf32>
    %cst = arith.constant dense<0.000000e+00> : vector<48x128xf32>
    %2 = tpu.matmul %1, %0, %cst {dimension_numbers = #tpu.dot_dimension_numbers<[1], [0], [0], [1], [0, 0, 1, 1], [], []>} : vector<48x16xf32>, vector<16x128xf32>, vector<48x128xf32> -> vector<48x128xf32>
    %3 = vector.extract_strided_slice %0 {offsets = [0, 0], sizes = [16, 1], strides = [1, 1]} : vector<16x128xf32> to vector<16x1xf32>
    %c3 = arith.constant 3 : index
    %c0_3 = arith.constant 0 : index
    %4 = vector.load %arg3[%c3, %c0_3] : memref<8x128xf32, #tpu.memory_space<vmem>>, vector<1x128xf32>
    %5 = vector.broadcast %3 : vector<16x1xf32> to vector<16x128xf32>
    %6 = vector.broadcast %4 : vector<1x128xf32> to vector<16x128xf32>
    %7 = arith.mulf %5, %6 : vector<16x128xf32>
    %8 = vector.extract_strided_slice %2 {offsets = [0, 0], sizes = [16, 1], strides = [1, 1]} : vector<48x128xf32> to vector<16x1xf32>
    %c4 = arith.constant 4 : index
    %c0_4 = arith.constant 0 : index
    %9 = vector.load %arg3[%c4, %c0_4] : memref<8x128xf32, #tpu.memory_space<vmem>>, vector<1x128xf32>
    %10 = vector.broadcast %8 : vector<16x1xf32> to vector<16x128xf32>
    %11 = vector.broadcast %9 : vector<1x128xf32> to vector<16x128xf32>
    %12 = arith.mulf %10, %11 : vector<16x128xf32>
    %13 = arith.addf %7, %12 : vector<16x128xf32>
    %14 = vector.extract_strided_slice %2 {offsets = [16, 0], sizes = [16, 1], strides = [1, 1]} : vector<48x128xf32> to vector<16x1xf32>
    %c5 = arith.constant 5 : index
    %c0_5 = arith.constant 0 : index
    %15 = vector.load %arg3[%c5, %c0_5] : memref<8x128xf32, #tpu.memory_space<vmem>>, vector<1x128xf32>
    %16 = vector.broadcast %14 : vector<16x1xf32> to vector<16x128xf32>
    %17 = vector.broadcast %15 : vector<1x128xf32> to vector<16x128xf32>
    %18 = arith.mulf %16, %17 : vector<16x128xf32>
    %19 = arith.addf %13, %18 : vector<16x128xf32>
    %20 = vector.extract_strided_slice %2 {offsets = [32, 0], sizes = [16, 1], strides = [1, 1]} : vector<48x128xf32> to vector<16x1xf32>
    %c6 = arith.constant 6 : index
    %c0_6 = arith.constant 0 : index
    %21 = vector.load %arg3[%c6, %c0_6] : memref<8x128xf32, #tpu.memory_space<vmem>>, vector<1x128xf32>
    %22 = vector.broadcast %20 : vector<16x1xf32> to vector<16x128xf32>
    %23 = vector.broadcast %21 : vector<1x128xf32> to vector<16x128xf32>
    %24 = arith.mulf %22, %23 : vector<16x128xf32>
    %25 = arith.addf %19, %24 : vector<16x128xf32>
    %c0_7 = arith.constant 0 : index
    %c0_8 = arith.constant 0 : index
    %26 = vector.load %arg3[%c0_7, %c0_8] : memref<8x128xf32, #tpu.memory_space<vmem>>, vector<1x128xf32>
    %27 = vector.broadcast %26 : vector<1x128xf32> to vector<16x128xf32>
    %28 = arith.addf %25, %27 : vector<16x128xf32>
    %cst_9 = arith.constant 0.000000e+00 : f32
    %29 = vector.broadcast %cst_9 : f32 to vector<16x128xf32>
    %30 = arith.maximumf %28, %29 : vector<16x128xf32>
    %c0_10 = arith.constant 0 : index
    %c0_11 = arith.constant 0 : index
    %31 = vector.load %arg0[%c0_10, %c0_11] : memref<48x16xf32, #tpu.memory_space<vmem>>, vector<32x16xf32>
    %cst_12 = arith.constant dense<0.000000e+00> : vector<32x128xf32>
    %32 = tpu.matmul %31, %30, %cst_12 {dimension_numbers = #tpu.dot_dimension_numbers<[1], [0], [0], [1], [0, 0, 1, 1], [], []>} : vector<32x16xf32>, vector<16x128xf32>, vector<32x128xf32> -> vector<32x128xf32>
    %33 = vector.extract_strided_slice %32 {offsets = [0, 0], sizes = [16, 128], strides = [1, 1]} : vector<32x128xf32> to vector<16x128xf32>
    %c16_i32 = arith.constant 16 : i32
    %34 = tpu.dynamic_rotate %33 by %c16_i32 dim 1 : vector<16x128xf32>, i32 -> vector<16x128xf32>
    %35 = arith.addf %30, %34 : vector<16x128xf32>
    %36 = vector.extract_strided_slice %32 {offsets = [16, 0], sizes = [16, 128], strides = [1, 1]} : vector<32x128xf32> to vector<16x128xf32>
    %c32_i32 = arith.constant 32 : i32
    %37 = tpu.dynamic_rotate %36 by %c32_i32 dim 1 : vector<16x128xf32>, i32 -> vector<16x128xf32>
    %38 = arith.addf %35, %37 : vector<16x128xf32>
    %c0_13 = arith.constant 0 : index
    %c0_14 = arith.constant 0 : index
    %c0_15 = arith.constant 0 : index
    %39 = vector.load %arg2[%c0_13, %c0_14, %c0_15] : memref<2x128x128xf32, #tpu.memory_space<vmem>>, vector<1x128x128xf32>
    %40 = vector.shape_cast %39 : vector<1x128x128xf32> to vector<128x128xf32>
    %cst_16 = arith.constant dense<0.000000e+00> : vector<16x128xf32>
    %41 = tpu.matmul %38, %40, %cst_16 {dimension_numbers = #tpu.dot_dimension_numbers<[1], [0], [0], [1], [0, 0, 1, 1], [], []>} : vector<16x128xf32>, vector<128x128xf32>, vector<16x128xf32> -> vector<16x128xf32>
    %c1 = arith.constant 1 : index
    %c0_17 = arith.constant 0 : index
    %42 = vector.load %arg3[%c1, %c0_17] : memref<8x128xf32, #tpu.memory_space<vmem>>, vector<1x128xf32>
    %43 = vector.broadcast %42 : vector<1x128xf32> to vector<16x128xf32>
    %44 = arith.addf %41, %43 : vector<16x128xf32>
    %cst_18 = arith.constant 0.000000e+00 : f32
    %45 = vector.broadcast %cst_18 : f32 to vector<16x128xf32>
    %46 = arith.maximumf %44, %45 : vector<16x128xf32>
    %c0_19 = arith.constant 0 : index
    %c0_20 = arith.constant 0 : index
    %47 = vector.load %arg0[%c0_19, %c0_20] : memref<48x16xf32, #tpu.memory_space<vmem>>, vector<16x16xf32>
    %cst_21 = arith.constant dense<0.000000e+00> : vector<16x128xf32>
    %48 = tpu.matmul %47, %46, %cst_21 {dimension_numbers = #tpu.dot_dimension_numbers<[1], [0], [0], [1], [0, 0, 1, 1], [], []>} : vector<16x16xf32>, vector<16x128xf32>, vector<16x128xf32> -> vector<16x128xf32>
    %c4_i32 = arith.constant 4 : i32
    %49 = tpu.dynamic_rotate %48 by %c4_i32 dim 1 : vector<16x128xf32>, i32 -> vector<16x128xf32>
    %50 = arith.addf %46, %49 : vector<16x128xf32>
    %c1_22 = arith.constant 1 : index
    %c0_23 = arith.constant 0 : index
    %c0_24 = arith.constant 0 : index
    %51 = vector.load %arg2[%c1_22, %c0_23, %c0_24] : memref<2x128x128xf32, #tpu.memory_space<vmem>>, vector<1x128x128xf32>
    %52 = vector.shape_cast %51 : vector<1x128x128xf32> to vector<128x128xf32>
    %cst_25 = arith.constant dense<0.000000e+00> : vector<16x128xf32>
    %53 = tpu.matmul %50, %52, %cst_25 {dimension_numbers = #tpu.dot_dimension_numbers<[1], [0], [0], [1], [0, 0, 1, 1], [], []>} : vector<16x128xf32>, vector<128x128xf32>, vector<16x128xf32> -> vector<16x128xf32>
    %c2 = arith.constant 2 : index
    %c0_26 = arith.constant 0 : index
    %54 = vector.load %arg3[%c2, %c0_26] : memref<8x128xf32, #tpu.memory_space<vmem>>, vector<1x128xf32>
    %55 = vector.broadcast %54 : vector<1x128xf32> to vector<16x128xf32>
    %56 = arith.addf %53, %55 : vector<16x128xf32>
    %57 = arith.negf %56 : vector<16x128xf32>
    %58 = math.exp %57 : vector<16x128xf32>
    %cst_27 = arith.constant 1.000000e+00 : f32
    %59 = vector.broadcast %cst_27 : f32 to vector<16x128xf32>
    %60 = arith.addf %59, %58 : vector<16x128xf32>
    %61 = arith.divf %59, %60 : vector<16x128xf32>
    %c0_28 = arith.constant 0 : index
    %c0_29 = arith.constant 0 : index
    %62 = vector.load %arg4[%c0_28, %c0_29] : memref<16x128xf32, #tpu.memory_space<vmem>>, vector<16x128xf32>
    tpu.vector_store %arg4[%c0_28, %c0_29], %61 {strides = array<i32>} : memref<16x128xf32, #tpu.memory_space<vmem>>, vector<16x128xf32>,
    return
  }
}

</mosaic_0001>

<llo_original>
// kernel: tag_net_pallas.1
$region0: #{tag_net_pallas.1}
  #allocation0 [shape = 'u32[]', space=smem, size = 0x4, offset = 0x4, fixed_abs, tag = 'smem constant byte address 0x4 - core index']
  #allocation1 [shape = 'u32[144,128]{1,0:T(1,128)}', space=vmem, size = 0x12000, scoped, tag = 'internal scratch']
  %s0 = inlined_call_operand.vmem [shape: f32[48,16], index: 0, kind: input, shape index: {}]
  %s1 = inlined_call_operand.vmem [shape: f32[16,128], index: 1, kind: input, shape index: {}]
  %s2 = inlined_call_operand.hbm [shape: f32[2,128,128], index: 2, kind: input, shape index: {}]
  %s3 = inlined_call_operand.vmem [shape: f32[8,128], index: 3, kind: input, shape index: {}]
  %s4 = inlined_call_operand.hbm [shape: f32[16,128], index: 4, kind: output, shape index: {}]
  %s5 = sld [smem:[#allocation0]]
  $region30: #{tag_net_pallas.1} parent=0
    _
  %s7 = ssub.s32 1, %s5
  %s8 = scalar_select 0, %s7, %s5
  $region1: #{tag_net_pallas.1} parent=0
    #allocation2 [shape = 'u8[131072]{0}', space=vmem, size = 0x20000, scoped, tag = 'input window, operand 2, single buffered']
    #allocation3 [shape = 's32[1]{0}', space=sflag, size = 0x4, scoped, tag = 'scoped memory for tag_net_pallas.1']
    #allocation4 [shape = 's32[1]{0}', space=sflag, size = 0x4, scoped, tag = 'scoped memory for tag_net_pallas.1']
    #allocation5 [shape = 'u8[8192]{0}', space=vmem, size = 0x2000, scoped, tag = 'output window, operand 0, single buffered']
    %9 = vsyncpa [#allocation3], 0
    %10 = vsyncpa [#allocation4], 0
    // Predicated region
    $region2: #{tag_net_pallas.1} parent=1 // pred_check
      _
    $region3: #{tag_net_pallas.1} parent=1 // pred_check_branch
      %12 = sbr.rel (0) target = $region5
    $region4: #{tag_net_pallas.1} parent=1 // pred_region
      _
    $region5: #{tag_net_pallas.1} parent=1 // pred_fallthru
      _
    // Predicated region
    $region6: #{tag_net_pallas.1} parent=1 // pred_check
      _
    $region7: #{tag_net_pallas.1} parent=1 // pred_check_branch
      %14 = sbr.rel (0) target = $region9
    $region8: #{tag_net_pallas.1} parent=1 // pred_region
      _
    $region9: #{tag_net_pallas.1} parent=1 // pred_fallthru
      _
    // Predicated region
    $region10: #{tag_net_pallas.1} parent=1 // pred_check
      _
    $region11: #{tag_net_pallas.1} parent=1 // pred_check_branch
      %16 = sbr.rel (0) target = $region13
    $region12: #{tag_net_pallas.1} parent=1 // pred_region
      %s18 = ssub.s32 4096, 4096
      %19 = vsyncadd [#allocation3], %s18
      %s20 = sshll.u32 [#allocation2], 4
      %s21 = int_to_ptr.vmem [resolvable:$true] %s20
      %26 = dma.hbm_to_vmem [thread:$0]  %s2, 4096, %s21, [#allocation3], 128, 128, 8
    $region13: #{tag_net_pallas.1} parent=1 // pred_fallthru
      _
    // Predicated region
    $region14: #{tag_net_pallas.1} parent=1 // pred_check
      _
    $region15: #{tag_net_pallas.1} parent=1 // pred_check_branch
      %28 = sbr.rel (0) target = $region17
    $region16: #{tag_net_pallas.1} parent=1 // pred_region
      _
    $region17: #{tag_net_pallas.1} parent=1 // pred_fallthru
      _
    // Predicated region
    $region18: #{tag_net_pallas.1} parent=1 // pred_check
      _
    $region19: #{tag_net_pallas.1} parent=1 // pred_check_branch
      %30 = sbr.rel (0) target = $region21
    $region20: #{tag_net_pallas.1} parent=1 // pred_region
      %31 = dma.done [#allocation3], 4096
    $region21: #{tag_net_pallas.1} parent=1 // pred_fallthru
      _
    %v32 = vld [vmem:[%s1] sm:$0xff]
    %v33 = vld [vmem:[%s1 + $0x8] sm:$0xff]
    %v34 = vld [vmem:[%s0] sm:$0xff]
    %v35 = vld [vmem:[%s0 + $0x8] sm:$0xff]
    %v36 = vld [vmem:[%s0 + $0x10] sm:$0xff]
    %v37 = vld [vmem:[%s0 + $0x18] sm:$0xff]
    %v38 = vld [vmem:[%s0 + $0x20] sm:$0xff]
    %v39 = vld [vmem:[%s0 + $0x28] sm:$0xff]
    %vm40 = vcmask 130048
    %v42 = vsel %vm40, %v34, 0
    %v45 = vsel %vm40, %v35, 0
    %v48 = vsel %vm40, %v36, 0
    %v51 = vsel %vm40, %v37, 0
    %v54 = vsel %vm40, %v38, 0
    %v57 = vsel %vm40, %v39, 0
    %59 = vmatprep.subr.mxu0 0.0
    %60 = vmatpush1.msra.mxu0 0.0
    %61 = vmatprep.subr.mxu0 0.0
    %62 = vmatpush1.msra.mxu0 0.0
    %63 = vmatprep.subr.mxu0 0.0
    %64 = vmatpush1.msra.mxu0 0.0
    %65 = vmatprep.subr.mxu0 0.0
    %66 = vmatpush1.msra.mxu0 0.0
    %67 = vmatprep.subr.mxu0 0.0
    %68 = vmatpush1.msra.mxu0 0.0
    %69 = vmatprep.subr.mxu0 0.0
    %70 = vmatpush1.msra.mxu0 0.0
    %71 = vmatprep.subr.mxu0 0.0
    %72 = vmatpush1.msra.mxu0 0.0
    %73 = vmatprep.subr.mxu0 0.0
    %74 = vmatpush1.msra.mxu0 0.0
    %75 = vmatprep.subr.mxu0 0.0
    %76 = vmatpush1.msra.mxu0 0.0
    %77 = vmatprep.subr.mxu0 0.0
    %78 = vmatpush1.msra.mxu0 0.0
    %79 = vmatprep.subr.mxu0 0.0
    %80 = vmatpush1.msra.mxu0 0.0
    %81 = vmatprep.subr.mxu0 0.0
    %82 = vmatpush1.msra.mxu0 0.0
    %83 = vmatprep.subr.mxu0 0.0
    %84 = vmatpush1.msra.mxu0 0.0
    %85 = vmatprep.subr.mxu0 0.0
    %86 = vmatpush1.msra.mxu0 0.0
    %87 = vmatprep.subr.mxu0 0.0
    %88 = vmatpush1.msra.mxu0 %v33
    %89 = vmatprep.subr.mxu0 0.0
    %90 = vmatpush1.msra.mxu0 %v32
    %91 = vmatprep.subr.mxu0 0.0
    %92 = vmatpush2.msra.mxu0 0.0
    %93 = vmatprep.subr.mxu0 0.0
    %94 = vmatpush2.msra.mxu0 0.0
    %95 = vmatprep.subr.mxu0 0.0
    %96 = vmatpush2.msra.mxu0 0.0
    %97 = vmatprep.subr.mxu0 0.0
    %98 = vmatpush2.msra.mxu0 0.0
    %99 = vmatprep.subr.mxu0 0.0
    %100 = vmatpush2.msra.mxu0 0.0
    %101 = vmatprep.subr.mxu0 0.0
    %102 = vmatpush2.msra.mxu0 0.0
    %103 = vmatprep.subr.mxu0 0.0
    %104 = vmatpush2.msra.mxu0 0.0
    %105 = vmatprep.subr.mxu0 0.0
    %106 = vmatpush2.msra.mxu0 0.0
    %107 = vmatprep.subr.mxu0 0.0
    %108 = vmatpush2.msra.mxu0 0.0
    %109 = vmatprep.subr.mxu0 0.0
    %110 = vmatpush2.msra.mxu0 0.0
    %111 = vmatprep.subr.mxu0 0.0
    %112 = vmatpush2.msra.mxu0 0.0
    %113 = vmatprep.subr.mxu0 0.0
    %114 = vmatpush2.msra.mxu0 0.0
    %115 = vmatprep.subr.mxu0 0.0
    %116 = vmatpush2.msra.mxu0 0.0
    %117 = vmatprep.subr.mxu0 0.0
    %118 = vmatpush2.msra.mxu0 0.0
    %119 = vmatprep.subr.mxu0 0.0
    %120 = vmatpush2.msra.mxu0 0.0
    %121 = vmatprep.subr.mxu0 0.0
    %122 = vmatpush2.msra.mxu0 0.0
    %123 = vmatprep.mubr.f32.mxu0 0.0
    %124 = vmatmul.mubr.f32.gmra.mxu0 %v42
    %v125 = vpop.f32.mrf.mxu0
    %v126 = vadd.f32 0.0, %v125
    %v127 = vpop.f32.mrf.mxu0
    %128 = vmatprep.mubr.f32.mxu0 0.0
    %129 = vmatmul.mubr.f32.gmra.mxu0 %v45
    %v130 = vpop.f32.mrf.mxu0
    %v131 = vadd.f32 0.0, %v130
    %v132 = vpop.f32.mrf.mxu0
    %133 = vmatprep.mubr.f32.mxu0 0.0
    %134 = vmatmul.mubr.f32.gmra.mxu0 %v48
    %v135 = vpop.f32.mrf.mxu0
    %v136 = vadd.f32 0.0, %v135
    %v137 = vpop.f32.mrf.mxu0
    %138 = vmatprep.mubr.f32.mxu0 0.0
    %139 = vmatmul.mubr.f32.gmra.mxu0 %v51
    %v140 = vpop.f32.mrf.mxu0
    %v141 = vadd.f32 0.0, %v140
    %v142 = vpop.f32.mrf.mxu0
    %143 = vmatprep.mubr.f32.mxu0 0.0
    %144 = vmatmul.mubr.f32.gmra.mxu0 %v54
    %v145 = vpop.f32.mrf.mxu0
    %v146 = vadd.f32 0.0, %v145
    %v147 = vpop.f32.mrf.mxu0
    %148 = vmatprep.mubr.f32.mxu0 0.0
    %149 = vmatmul.mubr.f32.gmra.mxu0 %v57
    %v150 = vpop.f32.mrf.mxu0
    %v151 = vadd.f32 0.0, %v150
    %v152 = vpop.f32.mrf.mxu0
    %153 = vdwg.mxu0
    %v154 = vld [vmem:[%s3 + $0x3] sm:$0x1]
    %156 = vset.pattern.permute.xlu0 0
    %157 = vperm.xlu0 %156, %v32
    %v158 = vpop.permute.xlu0 %157
    %161 = vset.pattern.permute.xlu0 0
    %162 = vperm.xlu0 %161, %v33
    %v163 = vpop.permute.xlu0 %162
    %v165 = vlaneseq
    %v166 = vshrl.u32 %v165, 7
    %v167 = vsub.s32 0, %v166
    %v168 = vrot.slane %v154, %v167
    %v169 = vmul.f32 %v158, %v168
    %v170 = vmul.f32 %v163, %v168
    %v171 = vld [vmem:[%s3 + $0x4] sm:$0x1]
    %173 = vset.pattern.permute.xlu0 0
    %174 = vperm.xlu0 %173, %v126
    %v175 = vpop.permute.xlu0 %174
    %178 = vset.pattern.permute.xlu0 0
    %179 = vperm.xlu0 %178, %v131
    %v180 = vpop.permute.xlu0 %179
    %v182 = vlaneseq
    %v183 = vshrl.u32 %v182, 7
    %v184 = vsub.s32 0, %v183
    %v185 = vrot.slane %v171, %v184
    %v186 = vmul.f32 %v175, %v185
    %v187 = vmul.f32 %v180, %v185
    %v188 = vadd.f32 %v169, %v186
    %v189 = vadd.f32 %v170, %v187
    %v190 = vld [vmem:[%s3 + $0x5] sm:$0x1]
    %192 = vset.pattern.permute.xlu0 0
    %193 = vperm.xlu0 %192, %v136
    %v194 = vpop.permute.xlu0 %193
    %197 = vset.pattern.permute.xlu0 0
    %198 = vperm.xlu0 %197, %v141
    %v199 = vpop.permute.xlu0 %198
    %v201 = vlaneseq
    %v202 = vshrl.u32 %v201, 7
    %v203 = vsub.s32 0, %v202
    %v204 = vrot.slane %v190, %v203
    %v205 = vmul.f32 %v194, %v204
    %v206 = vmul.f32 %v199, %v204
    %v207 = vadd.f32 %v188, %v205
    %v208 = vadd.f32 %v189, %v206
    %v209 = vld [vmem:[%s3 + $0x6] sm:$0x1]
    %211 = vset.pattern.permute.xlu0 0
    %212 = vperm.xlu0 %211, %v146
    %v213 = vpop.permute.xlu0 %212
    %216 = vset.pattern.permute.xlu0 0
    %217 = vperm.xlu0 %216, %v151
    %v218 = vpop.permute.xlu0 %217
    %v220 = vlaneseq
    %v221 = vshrl.u32 %v220, 7
    %v222 = vsub.s32 0, %v221
    %v223 = vrot.slane %v209, %v222
    %v224 = vmul.f32 %v213, %v223
    %v225 = vmul.f32 %v218, %v223
    %v226 = vadd.f32 %v207, %v224
    %v227 = vadd.f32 %v208, %v225
    %v228 = vld [vmem:[%s3] sm:$0x1]
    %v229 = vlaneseq
    %v230 = vshrl.u32 %v229, 7
    %v231 = vsub.s32 0, %v230
    %v232 = vrot.slane %v228, %v231
    %v233 = vadd.f32 %v226, %v232
    %v234 = vadd.f32 %v227, %v232
    %v235 = vmax.f32 %v233, 0.0
    %v236 = vmax.f32 %v234, 0.0
    %v237 = vld [vmem:[%s0] sm:$0xff]
    %v238 = vld [vmem:[%s0 + $0x8] sm:$0xff]
    %v239 = vld [vmem:[%s0 + $0x10] sm:$0xff]
    %v240 = vld [vmem:[%s0 + $0x18] sm:$0xff]
    %v242 = vsel %vm40, %v237, 0
    %v245 = vsel %vm40, %v238, 0
    %v248 = vsel %vm40, %v239, 0
    %v251 = vsel %vm40, %v240, 0
    %253 = vmatprep.subr.mxu0 0.0
    %254 = vmatpush1.msra.mxu0 0.0
    %255 = vmatprep.subr.mxu0 0.0
    %256 = vmatpush1.msra.mxu0 0.0
    %257 = vmatprep.subr.mxu0 0.0
    %258 = vmatpush1.msra.mxu0 0.0
    %259 = vmatprep.subr.mxu0 0.0
    %260 = vmatpush1.msra.mxu0 0.0
    %261 = vmatprep.subr.mxu0 0.0
    %262 = vmatpush1.msra.mxu0 0.0
    %263 = vmatprep.subr.mxu0 0.0
    %264 = vmatpush1.msra.mxu0 0.0
    %265 = vmatprep.subr.mxu0 0.0
    %266 = vmatpush1.msra.mxu0 0.0
    %267 = vmatprep.subr.mxu0 0.0
    %268 = vmatpush1.msra.mxu0 0.0
    %269 = vmatprep.subr.mxu0 0.0
    %270 = vmatpush1.msra.mxu0 0.0
    %271 = vmatprep.subr.mxu0 0.0
    %272 = vmatpush1.msra.mxu0 0.0
    %273 = vmatprep.subr.mxu0 0.0
    %274 = vmatpush1.msra.mxu0 0.0
    %275 = vmatprep.subr.mxu0 0.0
    %276 = vmatpush1.msra.mxu0 0.0
    %277 = vmatprep.subr.mxu0 0.0
    %278 = vmatpush1.msra.mxu0 0.0
    %279 = vmatprep.subr.mxu0 0.0
    %280 = vmatpush1.msra.mxu0 0.0
    %281 = vmatprep.subr.mxu0 0.0
    %282 = vmatpush1.msra.mxu0 %v236
    %283 = vmatprep.subr.mxu0 0.0
    %284 = vmatpush1.msra.mxu0 %v235
    %285 = vmatprep.subr.mxu0 0.0
    %286 = vmatpush2.msra.mxu0 0.0
    %287 = vmatprep.subr.mxu0 0.0
    %288 = vmatpush2.msra.mxu0 0.0
    %289 = vmatprep.subr.mxu0 0.0
    %290 = vmatpush2.msra.mxu0 0.0
    %291 = vmatprep.subr.mxu0 0.0
    %292 = vmatpush2.msra.mxu0 0.0
    %293 = vmatprep.subr.mxu0 0.0
    %294 = vmatpush2.msra.mxu0 0.0
    %295 = vmatprep.subr.mxu0 0.0
    %296 = vmatpush2.msra.mxu0 0.0
    %297 = vmatprep.subr.mxu0 0.0
    %298 = vmatpush2.msra.mxu0 0.0
    %299 = vmatprep.subr.mxu0 0.0
    %300 = vmatpush2.msra.mxu0 0.0
    %301 = vmatprep.subr.mxu0 0.0
    %302 = vmatpush2.msra.mxu0 0.0
    %303 = vmatprep.subr.mxu0 0.0
    %304 = vmatpush2.msra.mxu0 0.0
    %305 = vmatprep.subr.mxu0 0.0
    %306 = vmatpush2.msra.mxu0 0.0
    %307 = vmatprep.subr.mxu0 0.0
    %308 = vmatpush2.msra.mxu0 0.0
    %309 = vmatprep.subr.mxu0 0.0
    %310 = vmatpush2.msra.mxu0 0.0
    %311 = vmatprep.subr.mxu0 0.0
    %312 = vmatpush2.msra.mxu0 0.0
    %313 = vmatprep.subr.mxu0 0.0
    %314 = vmatpush2.msra.mxu0 0.0
    %315 = vmatprep.subr.mxu0 0.0
    %316 = vmatpush2.msra.mxu0 0.0
    %317 = vmatprep.mubr.f32.mxu0 0.0
    %318 = vmatmul.mubr.f32.gmra.mxu0 %v242
    %v319 = vpop.f32.mrf.mxu0
    %v320 = vadd.f32 0.0, %v319
    %v321 = vpop.f32.mrf.mxu0
    %322 = vmatprep.mubr.f32.mxu0 0.0
    %323 = vmatmul.mubr.f32.gmra.mxu0 %v245
    %v324 = vpop.f32.mrf.mxu0
    %v325 = vadd.f32 0.0, %v324
    %v326 = vpop.f32.mrf.mxu0
    %327 = vmatprep.mubr.f32.mxu0 0.0
    %328 = vmatmul.mubr.f32.gmra.mxu0 %v248
    %v329 = vpop.f32.mrf.mxu0
    %v330 = vadd.f32 0.0, %v329
    %v331 = vpop.f32.mrf.mxu0
    %332 = vmatprep.mubr.f32.mxu0 0.0
    %333 = vmatmul.mubr.f32.gmra.mxu0 %v251
    %v334 = vpop.f32.mrf.mxu0
    %v335 = vadd.f32 0.0, %v334
    %v336 = vpop.f32.mrf.mxu0
    %337 = vdwg.mxu0
    %338 = vrot.lane.b32.xlu0 %v320, 16
    %v339 = vpop.permute.xlu0 %338
    %340 = vrot.lane.b32.xlu0 %v325, 16
    %v341 = vpop.permute.xlu0 %340
    %v342 = vadd.f32 %v235, %v339
    %v343 = vadd.f32 %v236, %v341
    %344 = vrot.lane.b32.xlu0 %v330, 32
    %v345 = vpop.permute.xlu0 %344
    %346 = vrot.lane.b32.xlu0 %v335, 32
    %v347 = vpop.permute.xlu0 %346
    %v348 = vadd.f32 %v342, %v345
    %v349 = vadd.f32 %v343, %v347
    %v350 = vld [vmem:[#allocation2] sm:$0xff]
    %v351 = vld [vmem:[#allocation2 + $0x8] sm:$0xff]
    %v352 = vld [vmem:[#allocation2 + $0x10] sm:$0xff]
    %v353 = vld [vmem:[#allocation2 + $0x18] sm:$0xff]
    %v354 = vld [vmem:[#allocation2 + $0x20] sm:$0xff]
    %v355 = vld [vmem:[#allocation2 + $0x28] sm:$0xff]
    %v356 = vld [vmem:[#allocation2 + $0x30] sm:$0xff]
    %v357 = vld [vmem:[#allocation2 + $0x38] sm:$0xff]
    %v358 = vld [vmem:[#allocation2 + $0x40] sm:$0xff]
    %v359 = vld [vmem:[#allocation2 + $0x48] sm:$0xff]
    %v360 = vld [vmem:[#allocation2 + $0x50] sm:$0xff]
    %v361 = vld [vmem:[#allocation2 + $0x58] sm:$0xff]
    %v362 = vld [vmem:[#allocation2 + $0x60] sm:$0xff]
    %v363 = vld [vmem:[#allocation2 + $0x68] sm:$0xff]
    %v364 = vld [vmem:[#allocation2 + $0x70] sm:$0xff]
    %v365 = vld [vmem:[#allocation2 + $0x78] sm:$0xff]
    %v366 = vld [vmem:[%s3 + $0x1] sm:$0x1]
    %v367 = vlaneseq
    %v368 = vshrl.u32 %v367, 7
    %v369 = vsub.s32 0, %v368
    %v370 = vrot.slane %v366, %v369
    %371 = vmatprep.subr.mxu0 0.0
    %372 = vmatpush1.msra.mxu0 %v365
    %373 = vmatprep.subr.mxu0 0.0
    %374 = vmatpush1.msra.mxu0 %v364
    %375 = vmatprep.subr.mxu0 0.0
    %376 = vmatpush1.msra.mxu0 %v363
    %377 = vmatprep.subr.mxu0 0.0
    %378 = vmatpush1.msra.mxu0 %v362
    %379 = vmatprep.subr.mxu0 0.0
    %380 = vmatpush1.msra.mxu0 %v361
    %381 = vmatprep.subr.mxu0 0.0
    %382 = vmatpush1.msra.mxu0 %v360
    %383 = vmatprep.subr.mxu0 0.0
    %384 = vmatpush1.msra.mxu0 %v359
    %385 = vmatprep.subr.mxu0 0.0
    %386 = vmatpush1.msra.mxu0 %v358
    %387 = vmatprep.subr.mxu0 0.0
    %388 = vmatpush1.msra.mxu0 %v357
    %389 = vmatprep.subr.mxu0 0.0
    %390 = vmatpush1.msra.mxu0 %v356
    %391 = vmatprep.subr.mxu0 0.0
    %392 = vmatpush1.msra.mxu0 %v355
    %393 = vmatprep.subr.mxu0 0.0
    %394 = vmatpush1.msra.mxu0 %v354
    %395 = vmatprep.subr.mxu0 0.0
    %396 = vmatpush1.msra.mxu0 %v353
    %397 = vmatprep.subr.mxu0 0.0
    %398 = vmatpush1.msra.mxu0 %v352
    %399 = vmatprep.subr.mxu0 0.0
    %400 = vmatpush1.msra.mxu0 %v351
    %401 = vmatprep.subr.mxu0 0.0
    %402 = vmatpush1.msra.mxu0 %v350
    %403 = vmatprep.subr.mxu0 0.0
    %404 = vmatpush2.msra.mxu0 0.0
    %405 = vmatprep.subr.mxu0 0.0
    %406 = vmatpush2.msra.mxu0 0.0
    %407 = vmatprep.subr.mxu0 0.0
    %408 = vmatpush2.msra.mxu0 0.0
    %409 = vmatprep.subr.mxu0 0.0
    %410 = vmatpush2.msra.mxu0 0.0
    %411 = vmatprep.subr.mxu0 0.0
    %412 = vmatpush2.msra.mxu0 0.0
    %413 = vmatprep.subr.mxu0 0.0
    %414 = vmatpush2.msra.mxu0 0.0
    %415 = vmatprep.subr.mxu0 0.0
    %416 = vmatpush2.msra.mxu0 0.0
    %417 = vmatprep.subr.mxu0 0.0
    %418 = vmatpush2.msra.mxu0 0.0
    %419 = vmatprep.subr.mxu0 0.0
    %420 = vmatpush2.msra.mxu0 0.0
    %421 = vmatprep.subr.mxu0 0.0
    %422 = vmatpush2.msra.mxu0 0.0
    %423 = vmatprep.subr.mxu0 0.0
    %424 = vmatpush2.msra.mxu0 0.0
    %425 = vmatprep.subr.mxu0 0.0
    %426 = vmatpush2.msra.mxu0 0.0
    %427 = vmatprep.subr.mxu0 0.0
    %428 = vmatpush2.msra.mxu0 0.0
    %429 = vmatprep.subr.mxu0 0.0
    %430 = vmatpush2.msra.mxu0 0.0
    %431 = vmatprep.subr.mxu0 0.0
    %432 = vmatpush2.msra.mxu0 0.0
    %433 = vmatprep.subr.mxu0 0.0
    %434 = vmatpush2.msra.mxu0 0.0
    %435 = vmatprep.mubr.f32.mxu0 0.0
    %436 = vmatmul.mubr.f32.gmra.mxu0 %v348
    %v437 = vpop.f32.mrf.mxu0
    %v438 = vadd.f32 %v370, %v437
    %v439 = vpop.f32.mrf.mxu0
    %440 = vmatprep.mubr.f32.mxu0 0.0
    %441 = vmatmul.mubr.f32.gmra.mxu0 %v349
    %v442 = vpop.f32.mrf.mxu0
    %v443 = vadd.f32 %v370, %v442
    %v444 = vpop.f32.mrf.mxu0
    %445 = vdwg.mxu0
    %v446 = vmax.f32 %v438, 0.0
    %v447 = vmax.f32 %v443, 0.0
    %v448 = vld [vmem:[%s0] sm:$0xff]
    %v449 = vld [vmem:[%s0 + $0x8] sm:$0xff]
    %v451 = vsel %vm40, %v448, 0
    %v454 = vsel %vm40, %v449, 0
    %456 = vmatprep.subr.mxu0 0.0
    %457 = vmatpush1.msra.mxu0 0.0
    %458 = vmatprep.subr.mxu0 0.0
    %459 = vmatpush1.msra.mxu0 0.0
    %460 = vmatprep.subr.mxu0 0.0
    %461 = vmatpush1.msra.mxu0 0.0
    %462 = vmatprep.subr.mxu0 0.0
    %463 = vmatpush1.msra.mxu0 0.0
    %464 = vmatprep.subr.mxu0 0.0
    %465 = vmatpush1.msra.mxu0 0.0
    %466 = vmatprep.subr.mxu0 0.0
    %467 = vmatpush1.msra.mxu0 0.0
    %468 = vmatprep.subr.mxu0 0.0
    %469 = vmatpush1.msra.mxu0 0.0
    %470 = vmatprep.subr.mxu0 0.0
    %471 = vmatpush1.msra.mxu0 0.0
    %472 = vmatprep.subr.mxu0 0.0
    %473 = vmatpush1.msra.mxu0 0.0
    %474 = vmatprep.subr.mxu0 0.0
    %475 = vmatpush1.msra.mxu0 0.0
    %476 = vmatprep.subr.mxu0 0.0
    %477 = vmatpush1.msra.mxu0 0.0
    %478 = vmatprep.subr.mxu0 0.0
    %479 = vmatpush1.msra.mxu0 0.0
    %480 = vmatprep.subr.mxu0 0.0
    %481 = vmatpush1.msra.mxu0 0.0
    %482 = vmatprep.subr.mxu0 0.0
    %483 = vmatpush1.msra.mxu0 0.0
    %484 = vmatprep.subr.mxu0 0.0
    %485 = vmatpush1.msra.mxu0 %v447
    %486 = vmatprep.subr.mxu0 0.0
    %487 = vmatpush1.msra.mxu0 %v446
    %488 = vmatprep.subr.mxu0 0.0
    %489 = vmatpush2.msra.mxu0 0.0
    %490 = vmatprep.subr.mxu0 0.0
    %491 = vmatpush2.msra.mxu0 0.0
    %492 = vmatprep.subr.mxu0 0.0
    %493 = vmatpush2.msra.mxu0 0.0
    %494 = vmatprep.subr.mxu0 0.0
    %495 = vmatpush2.msra.mxu0 0.0
    %496 = vmatprep.subr.mxu0 0.0
    %497 = vmatpush2.msra.mxu0 0.0
    %498 = vmatprep.subr.mxu0 0.0
    %499 = vmatpush2.msra.mxu0 0.0
    %500 = vmatprep.subr.mxu0 0.0
    %501 = vmatpush2.msra.mxu0 0.0
    %502 = vmatprep.subr.mxu0 0.0
    %503 = vmatpush2.msra.mxu0 0.0
    %504 = vmatprep.subr.mxu0 0.0
    %505 = vmatpush2.msra.mxu0 0.0
    %506 = vmatprep.subr.mxu0 0.0
    %507 = vmatpush2.msra.mxu0 0.0
    %508 = vmatprep.subr.mxu0 0.0
    %509 = vmatpush2.msra.mxu0 0.0
    %510 = vmatprep.subr.mxu0 0.0
    %511 = vmatpush2.msra.mxu0 0.0
    %512 = vmatprep.subr.mxu0 0.0
    %513 = vmatpush2.msra.mxu0 0.0
    %514 = vmatprep.subr.mxu0 0.0
    %515 = vmatpush2.msra.mxu0 0.0
    %516 = vmatprep.subr.mxu0 0.0
    %517 = vmatpush2.msra.mxu0 0.0
    %518 = vmatprep.subr.mxu0 0.0
    %519 = vmatpush2.msra.mxu0 0.0
    %520 = vmatprep.mubr.f32.mxu0 0.0
    %521 = vmatmul.mubr.f32.gmra.mxu0 %v451
    %v522 = vpop.f32.mrf.mxu0
    %v523 = vadd.f32 0.0, %v522
    %v524 = vpop.f32.mrf.mxu0
    %525 = vmatprep.mubr.f32.mxu0 0.0
    %526 = vmatmul.mubr.f32.gmra.mxu0 %v454
    %v527 = vpop.f32.mrf.mxu0
    %v528 = vadd.f32 0.0, %v527
    %v529 = vpop.f32.mrf.mxu0
    %530 = vdwg.mxu0
    %531 = vrot.lane.b32.xlu0 %v523, 4
    %v532 = vpop.permute.xlu0 %531
    %533 = vrot.lane.b32.xlu0 %v528, 4
    %v534 = vpop.permute.xlu0 %533
    %v535 = vadd.f32 %v446, %v532
    %v536 = vadd.f32 %v447, %v534
    %s537 = scalar_lea.vmem [#allocation2], 128
    %v538 = vld [vmem:[%s537] sm:$0xff]
    %v539 = vld [vmem:[%s537 + $0x8] sm:$0xff]
    %v540 = vld [vmem:[%s537 + $0x10] sm:$0xff]
    %v541 = vld [vmem:[%s537 + $0x18] sm:$0xff]
    %v542 = vld [vmem:[%s537 + $0x20] sm:$0xff]
    %v543 = vld [vmem:[%s537 + $0x28] sm:$0xff]
    %v544 = vld [vmem:[%s537 + $0x30] sm:$0xff]
    %v545 = vld [vmem:[%s537 + $0x38] sm:$0xff]
    %v546 = vld [vmem:[%s537 + $0x40] sm:$0xff]
    %v547 = vld [vmem:[%s537 + $0x48] sm:$0xff]
    %v548 = vld [vmem:[%s537 + $0x50] sm:$0xff]
    %v549 = vld [vmem:[%s537 + $0x58] sm:$0xff]
    %v550 = vld [vmem:[%s537 + $0x60] sm:$0xff]
    %v551 = vld [vmem:[%s537 + $0x68] sm:$0xff]
    %v552 = vld [vmem:[%s537 + $0x70] sm:$0xff]
    %v553 = vld [vmem:[%s537 + $0x78] sm:$0xff]
    %v554 = vld [vmem:[%s3 + $0x2] sm:$0x1]
    %v555 = vlaneseq
    %v556 = vshrl.u32 %v555, 7
    %v557 = vsub.s32 0, %v556
    %v558 = vrot.slane %v554, %v557
    %559 = vmatprep.subr.mxu0 0.0
    %560 = vmatpush1.msra.mxu0 %v553
    %561 = vmatprep.subr.mxu0 0.0
    %562 = vmatpush1.msra.mxu0 %v552
    %563 = vmatprep.subr.mxu0 0.0
    %564 = vmatpush1.msra.mxu0 %v551
    %565 = vmatprep.subr.mxu0 0.0
    %566 = vmatpush1.msra.mxu0 %v550
    %567 = vmatprep.subr.mxu0 0.0
    %568 = vmatpush1.msra.mxu0 %v549
    %569 = vmatprep.subr.mxu0 0.0
    %570 = vmatpush1.msra.mxu0 %v548
    %571 = vmatprep.subr.mxu0 0.0
    %572 = vmatpush1.msra.mxu0 %v547
    %573 = vmatprep.subr.mxu0 0.0
    %574 = vmatpush1.msra.mxu0 %v546
    %575 = vmatprep.subr.mxu0 0.0
    %576 = vmatpush1.msra.mxu0 %v545
    %577 = vmatprep.subr.mxu0 0.0
    %578 = vmatpush1.msra.mxu0 %v544
    %579 = vmatprep.subr.mxu0 0.0
    %580 = vmatpush1.msra.mxu0 %v543
    %581 = vmatprep.subr.mxu0 0.0
    %582 = vmatpush1.msra.mxu0 %v542
    %583 = vmatprep.subr.mxu0 0.0
    %584 = vmatpush1.msra.mxu0 %v541
    %585 = vmatprep.subr.mxu0 0.0
    %586 = vmatpush1.msra.mxu0 %v540
    %587 = vmatprep.subr.mxu0 0.0
    %588 = vmatpush1.msra.mxu0 %v539
    %589 = vmatprep.subr.mxu0 0.0
    %590 = vmatpush1.msra.mxu0 %v538
    %591 = vmatprep.subr.mxu0 0.0
    %592 = vmatpush2.msra.mxu0 0.0
    %593 = vmatprep.subr.mxu0 0.0
    %594 = vmatpush2.msra.mxu0 0.0
    %595 = vmatprep.subr.mxu0 0.0
    %596 = vmatpush2.msra.mxu0 0.0
    %597 = vmatprep.subr.mxu0 0.0
    %598 = vmatpush2.msra.mxu0 0.0
    %599 = vmatprep.subr.mxu0 0.0
    %600 = vmatpush2.msra.mxu0 0.0
    %601 = vmatprep.subr.mxu0 0.0
    %602 = vmatpush2.msra.mxu0 0.0
    %603 = vmatprep.subr.mxu0 0.0
    %604 = vmatpush2.msra.mxu0 0.0
    %605 = vmatprep.subr.mxu0 0.0
    %606 = vmatpush2.msra.mxu0 0.0
    %607 = vmatprep.subr.mxu0 0.0
    %608 = vmatpush2.msra.mxu0 0.0
    %609 = vmatprep.subr.mxu0 0.0
    %610 = vmatpush2.msra.mxu0 0.0
    %611 = vmatprep.subr.mxu0 0.0
    %612 = vmatpush2.msra.mxu0 0.0
    %613 = vmatprep.subr.mxu0 0.0
    %614 = vmatpush2.msra.mxu0 0.0
    %615 = vmatprep.subr.mxu0 0.0
    %616 = vmatpush2.msra.mxu0 0.0
    %617 = vmatprep.subr.mxu0 0.0
    %618 = vmatpush2.msra.mxu0 0.0
    %619 = vmatprep.subr.mxu0 0.0
    %620 = vmatpush2.msra.mxu0 0.0
    %621 = vmatprep.subr.mxu0 0.0
    %622 = vmatpush2.msra.mxu0 0.0
    %623 = vmatprep.mubr.f32.mxu0 0.0
    %624 = vmatmul.mubr.f32.gmra.mxu0 %v535
    %v625 = vpop.f32.mrf.mxu0
    %v626 = vadd.f32 %v558, %v625
    %v627 = vpop.f32.mrf.mxu0
    %628 = vmatprep.mubr.f32.mxu0 0.0
    %629 = vmatmul.mubr.f32.gmra.mxu0 %v536
    %v630 = vpop.f32.mrf.mxu0
    %v631 = vadd.f32 %v558, %v630
    %v632 = vpop.f32.mrf.mxu0
    %633 = vdwg.mxu0
    %v634 = vxor.u32 %v626, 2147483648
    %v635 = vxor.u32 %v631, 2147483648
    %v636 = vmul.f32 %v634, 1.442695
    %v637 = vpow.pop %v636
    %v638 = vmul.f32 %v635, 1.442695
    %v639 = vpow.pop %v638
    %v640 = vadd.f32 %v637, 1.0
    %v641 = vadd.f32 %v639, 1.0
    %v642 = vrcp.pop %v640
    %v643 = vmul.f32 1.0, %v642
    %v644 = vrcp.pop %v641
    %v645 = vmul.f32 1.0, %v644
    %646 = vst [vmem:[#allocation5] sm:$0xff] %v643
    %647 = vst [vmem:[#allocation5 + $0x8] sm:$0xff] %v645
    // Predicated region
    $region22: #{tag_net_pallas.1} parent=1 // pred_check
      _
    $region23: #{tag_net_pallas.1} parent=1 // pred_check_branch
      %649 = sbr.rel (0) target = $region25
    $region24: #{tag_net_pallas.1} parent=1 // pred_region
      %s651 = ssub.s32 256, 256
      %652 = vsyncadd [#allocation4], %s651
      %s653 = sshll.u32 [#allocation5], 4
      %s654 = int_to_ptr.vmem [resolvable:$true] %s653
      %659 = dma.vmem_to_hbm [thread:$0]  %s654, 256, %s4, [#allocation4], 128, 128, 8
    $region25: #{tag_net_pallas.1} parent=1 // pred_fallthru
      _
    // Predicated region
    $region26: #{tag_net_pallas.1} parent=1 // pred_check
      _
    $region27: #{tag_net_pallas.1} parent=1 // pred_check_branch
      %661 = sbr.rel (0) target = $region29
    $region28: #{tag_net_pallas.1} parent=1 // pred_region
      %662 = dma.done [#allocation4], 256
    $region29: #{tag_net_pallas.1} parent=1 // pred_fallthru
      _
    %663 = vsyncpa [#allocation3], 1
    %664 = vsyncpa [#allocation4], 1

</llo_original>
